<compile_context>
chip_gen: v6e
topology: v6e:2x2x1
jax: 0.10.0
libtpu: 0.0.40
codegen_flags: <defaults>
</compile_context>

<pallas_src>
import math
from functools import partial

import jax
import jax.numpy as jnp
import numpy as np
from jax.experimental import pallas as pl
from jax.experimental.pallas import tpu as pltpu

_INV_SQRT2 = 1.0 / math.sqrt(2.0)


def _cdiv(a, b):
    return -(-a // b)


def _round_up(a, b):
    return _cdiv(a, b) * b


# ---------------------------------------------------------------------------
# Kernels
# ---------------------------------------------------------------------------
def _stats_kernel(x_ref, w_ref, s1_ref, s2_ref):
    """Stats-only pass: (tile_f, R*Cin) @ (R*Cin, L) matmul reduced on the fly
    to per-column sum / sum-of-squares.  Only x is read from HBM; the matmul
    result is never written back (it is recomputed in Pass B)."""
    @pl.when(pl.program_id(0) == 0)
    def _():
        s1_ref[...] = jnp.zeros_like(s1_ref)
        s2_ref[...] = jnp.zeros_like(s2_ref)

    y = jnp.dot(x_ref[...], w_ref[...], preferred_element_type=jnp.float32)
    s1_ref[...] += jnp.sum(y, axis=0, keepdims=True)
    s2_ref[...] += jnp.sum(y * y, axis=0, keepdims=True)


def _deconv_bn_gelu_kernel(x_ref, w_ref, scale_ref, shift_ref, o_ref):
    """Fused transposed-conv matmul + BatchNorm affine (precomputed per-column
    scale/shift) + exact erf-GELU (torch.nn.GELU default).  Lane-dense
    (tile_f, L) output blocks, L a multiple of 128."""
    y = jnp.dot(x_ref[...], w_ref[...], preferred_element_type=jnp.float32)
    z = y * scale_ref[...] + shift_ref[...]
    # TODO(synk): if v7x profiling shows VALU saturation here, switch to the
    # tanh-approx GELU (EUP slot) and document the numerics delta vs torch.
    o_ref[...] = 0.5 * z * (1.0 + jax.lax.erf(z * _INV_SQRT2))


# ---------------------------------------------------------------------------
# Sizing helpers (generation-aware VMEM budget)
# ---------------------------------------------------------------------------
def _vmem_budget_bytes():
    cap = 64 * 1024 * 1024                       # v7x worst case if query fails
    try:
        info = pltpu.get_tpu_info()
        cap = int(getattr(info, "vmem_capacity_bytes", cap)) or cap
    except Exception:
        pass
    return (3 * cap) // 4


def _est_vmem_bytes(tile_f, rcin, L):
    lane = lambda n: _round_up(n, 128)
    x_blk = tile_f * lane(rcin) * 4 * 2          # double-buffered input blocks
    o_blk = tile_f * lane(L) * 4 * 2             # double-buffered output blocks
    w_blk = _round_up(rcin, 8) * lane(L) * 4 * 2
    tmp = 3 * tile_f * lane(L) * 4               # y / z / erf temporaries
    return x_blk + o_blk + w_blk + tmp + 4 * lane(L) * 4


# ---------------------------------------------------------------------------
# Wrapper
# ---------------------------------------------------------------------------
@partial(jax.jit, static_argnames=("eps", "tile_f"))
def deconv_block(x_nchw, w, b, gamma, beta, *, eps=1e-5, tile_f=None):
    """x_nchw: (N, Cin, H, W); w: (Cin, Cout, 2, 2); b/gamma/beta: (Cout,).
    Returns NCHW (N, Cout, 2H, 2W).

    `b` is accepted for interface parity but unused: training-mode BatchNorm
    subtracts the per-channel batch mean, so a per-channel ConvTranspose bias
    cancels exactly.  (If this block is ever evaluated with running/eval-mode
    statistics, the bias must be reinstated.)"""
    del b
    N, Cin, H, Wd = x_nchw.shape
    Cout = w.shape[1]
    K2 = 4 * Cout                        # matmul columns per pixel: (kh, kw, cout)
    M = N * H * Wd                       # input pixels

    # Pack R consecutive pixels per matmul row so L = R*4*Cout is a multiple
    # of 128 (lane-dense stores).  R kept minimal (R == 1 for Cout % 32 == 0).
    R = 32 // math.gcd(Cout, 32)
    rcin = R * Cin
    L = R * K2

    F = _cdiv(M, R)                      # packed rows actually needed
    budget = _vmem_budget_bytes()
    if tile_f is None:
        tf = max(512, (2 * 1024 * 1024) // (L * 4))   # ~2 MiB f32 output block
    else:
        tf = int(tile_f)
    tf = max(8, (tf // 8) * 8)
    tf = min(tf, _round_up(F, 8))
    while _est_vmem_bytes(tf, rcin, L) > budget and tf > 8:
        tf = max(8, ((tf // 2) // 8) * 8)
    T = _cdiv(F, tf)
    F_pad = T * tf
    M_pad = F_pad * R
    vmem_limit = int(budget)

    f32 = jnp.float32
    # Channels-last (M, Cin), zero-padded (padded rows contribute nothing to
    # the batch statistics since the bias is dropped), packed R pixels/row.
    # Under jit the transpose / pad / reshape fuse into a single copy of x.
    x2d = jnp.transpose(x_nchw, (0, 2, 3, 1)).reshape(M, Cin).astype(f32)
    x2d = jnp.pad(x2d, ((0, M_pad - M), (0, 0)))
    xR = x2d.reshape(F_pad, rcin)

    # (Cin, 4*Cout) weight, columns ordered (kh, kw, cout); block-diagonal
    # R-fold replication so the matmul directly emits the packed layout.
    w2d = jnp.transpose(w, (0, 2, 3, 1)).reshape(Cin, K2).astype(f32)
    w_bd = jnp.kron(jnp.eye(R, dtype=f32), w2d)           # (R*Cin, L)

    # ---- Pass A: batch statistics (reads only x; tiny accumulator outputs).
    s1, s2 = pl.pallas_call(
        _stats_kernel,
        out_shape=(jax.ShapeDtypeStruct((1, L), f32),
                   jax.ShapeDtypeStruct((1, L), f32)),
        grid=(T,),
        in_specs=[pl.BlockSpec((tf, rcin), lambda i: (i, 0)),
                  pl.BlockSpec((rcin, L), lambda i: (0, 0))],
        out_specs=(pl.BlockSpec((1, L), lambda i: (0, 0)),
                   pl.BlockSpec((1, L), lambda i: (0, 0))),
        compiler_params=pltpu.CompilerParams(
            dimension_semantics=("arbitrary",),
            vmem_limit_bytes=vmem_limit),
    )(xR, w_bd)

    # ---- Fold stats -> per-channel mean / var -> BN scale & shift (tiny). --
    count = f32(M * 4)                                   # N * 2H * 2W outputs
    ch_sum = s1[0].reshape(R * 4, Cout).sum(axis=0)
    ch_sq = s2[0].reshape(R * 4, Cout).sum(axis=0)
    mean = ch_sum / count
    # E[y^2] - mean^2 can cancel; clamp at 0.
    # TODO(synk): Welford/compensated accumulation if inputs can carry very
    # large per-channel means.
    var = jnp.maximum(ch_sq / count - mean * mean, 0.0)
    inv_std = jax.lax.rsqrt(var + eps)
    scale_c = gamma.astype(f32) * inv_std
    shift_c = beta.astype(f32) - mean * scale_c
    scale = jnp.tile(scale_c, R * 4)[None, :]            # (1, L), matches cols
    shift = jnp.tile(shift_c, R * 4)[None, :]

    # ---- Pass B: recompute matmul, fuse BN + GELU, single output write. ----
    out_pk = pl.pallas_call(
        _deconv_bn_gelu_kernel,
        out_shape=jax.ShapeDtypeStruct((F_pad, L), f32),
        grid=(T,),
        in_specs=[pl.BlockSpec((tf, rcin), lambda i: (i, 0)),
                  pl.BlockSpec((rcin, L), lambda i: (0, 0)),
                  pl.BlockSpec((1, L), lambda i: (0, 0)),
                  pl.BlockSpec((1, L), lambda i: (0, 0))],
        out_specs=pl.BlockSpec((tf, L), lambda i: (i, 0)),
        compiler_params=pltpu.CompilerParams(
            dimension_semantics=("parallel",),
            vmem_limit_bytes=vmem_limit),
    )(xR, w_bd, scale, shift)

    # ---- Epilogue: single composite transpose to NCHW (reshapes = bitcasts).
    # TODO(synk): emit NHWC directly (in-kernel 2-row interleave in the
    # out_spec) for channels-last consumers to remove this last copy.
    out6 = out_pk.reshape(M_pad, K2)[:M].reshape(N, H, Wd, 2, 2, Cout)
    out = out6.transpose(0, 5, 1, 3, 2, 4).reshape(N, Cout, 2 * H, 2 * Wd)
    return out


# ---------------------------------------------------------------------------
# Pure-JAX reference (for verification)
# ---------------------------------------------------------------------------
def reference(x, w, b, gamma, beta, eps=1e-5):
    N, Cin, H, Wd = x.shape
    Cout = w.shape[1]
    t = jnp.einsum("nchw,cokl->nohkwl", x, w)            # (N,Cout,H,2,W,2)
    t = t.reshape(N, Cout, 2 * H, 2 * Wd) + b[None, :, None, None]
    mean = t.mean(axis=(0, 2, 3), keepdims=True)
    var = t.var(axis=(0, 2, 3), keepdims=True)           # biased (BN norm)
    z = (t - mean) / jnp.sqrt(var + eps)
    z = z * gamma[None, :, None, None] + beta[None, :, None, None]
    return jax.nn.gelu(z, approximate=False)


# ---------------------------------------------------------------------------
if __name__ == "__main__":
    def _make_inputs(key, N, Cin, Cout, H, W):
        kx, kw, kb, kg, kbt = jax.random.split(key, 5)
        x = jax.random.normal(kx, (N, Cin, H, W), jnp.float32)
        bound = 1.0 / math.sqrt(Cin * 2 * 2)
        w = jax.random.uniform(kw, (Cin, Cout, 2, 2), jnp.float32, -bound, bound)
        b = jax.random.uniform(kb, (Cout,), jnp.float32, -bound, bound)
        gamma = 1.0 + 0.1 * jax.random.normal(kg, (Cout,), jnp.float32)
        beta = 0.1 * jax.random.normal(kbt, (Cout,), jnp.float32)
        return x, w, b, gamma, beta

    key = jax.random.PRNGKey(0)
    k1, k2, k3 = jax.random.split(key, 3)

    # 1) multi-step grid (tile_f=32 -> 4 accumulation steps), Cout=8 (R=4).
    x, w, b, gamma, beta = _make_inputs(k1, 2, 4, 8, 16, 16)
    out = jax.block_until_ready(deconv_block(x, w, b, gamma, beta, tile_f=32))
    assert out.shape == (2, 8, 32, 32)
    np.testing.assert_allclose(np.asarray(out),
                               np.asarray(reference(x, w, b, gamma, beta)),
                               rtol=1e-3, atol=1e-3)

    # 2) non-divisible N*H*W -> zero-padded tail, auto tile size.
    x2, w2, b2, g2, bt2 = _make_inputs(k2, 1, 4, 8, 10, 10)
    out2 = jax.block_until_ready(deconv_block(x2, w2, b2, g2, bt2))
    assert out2.shape == (1, 8, 20, 20)
    np.testing.assert_allclose(np.asarray(out2),
                               np.asarray(reference(x2, w2, b2, g2, bt2)),
                               rtol=1e-3, atol=1e-3)

    # 3) Cout not a power of two (R=8, L=384), small spatial.
    x3, w3, b3, g3, bt3 = _make_inputs(k3, 1, 6, 12, 8, 8)
    out3 = jax.block_until_ready(deconv_block(x3, w3, b3, g3, bt3))
    assert out3.shape == (1, 12, 16, 16)
    np.testing.assert_allclose(np.asarray(out3),
                               np.asarray(reference(x3, w3, b3, g3, bt3)),
                               rtol=1e-3, atol=1e-3)

    print("KERNEL_OK")
</pallas_src>

<mosaic_0001>
module attributes {stable_mosaic.version = 11 : i64} {
  func.func @_stats_kernel(%arg0: i32, %arg1: memref<32x16xf32, #tpu.memory_space<vmem>>, %arg2: memref<16x128xf32, #tpu.memory_space<vmem>>, %arg3: memref<1x128xf32, #tpu.memory_space<vmem>>, %arg4: memref<1x128xf32, #tpu.memory_space<vmem>>) attributes {dimension_semantics = [#tpu.dimension_semantics<arbitrary>], iteration_bounds = array<i64: 4>, scalar_prefetch = 0 : i64, scratch_operands = 0 : i64, tpu.core_type = #tpu.core_type<tc>, window_params = [{transform_indices = @transform_0, window_bounds = array<i64: 32, 16>}, {pipeline_mode = #tpu.pipeline_mode<synchronous>, transform_indices = @transform_1, window_bounds = array<i64: 16, 128>}, {pipeline_mode = #tpu.pipeline_mode<synchronous>, transform_indices = @transform_2, window_bounds = array<i64: 1, 128>}, {pipeline_mode = #tpu.pipeline_mode<synchronous>, transform_indices = @transform_3, window_bounds = array<i64: 1, 128>}]} {
    %c0_i32 = arith.constant 0 : i32
    %0 = arith.cmpi eq, %arg0, %c0_i32 : i32
    %1 = arith.extui %0 : i1 to i32
    %c0_i32_0 = arith.constant 0 : i32
    %2 = arith.cmpi ne, %1, %c0_i32_0 : i32
    scf.if %2 {
      %cst_14 = arith.constant 0.000000e+00 : f32
      %17 = vector.broadcast %cst_14 : f32 to vector<1x128xf32>
      %c0_15 = arith.constant 0 : index
      %c0_16 = arith.constant 0 : index
      %18 = vector.load %arg3[%c0_15, %c0_16] : memref<1x128xf32, #tpu.memory_space<vmem>>, vector<1x128xf32>
      tpu.vector_store %arg3[%c0_15, %c0_16], %17 {strides = array<i32>} : memref<1x128xf32, #tpu.memory_space<vmem>>, vector<1x128xf32>,
      %cst_17 = arith.constant 0.000000e+00 : f32
      %19 = vector.broadcast %cst_17 : f32 to vector<1x128xf32>
      %c0_18 = arith.constant 0 : index
      %c0_19 = arith.constant 0 : index
      %20 = vector.load %arg4[%c0_18, %c0_19] : memref<1x128xf32, #tpu.memory_space<vmem>>, vector<1x128xf32>
      tpu.vector_store %arg4[%c0_18, %c0_19], %19 {strides = array<i32>} : memref<1x128xf32, #tpu.memory_space<vmem>>, vector<1x128xf32>,
    } else {
    }
    %c0 = arith.constant 0 : index
    %c0_1 = arith.constant 0 : index
    %3 = vector.load %arg1[%c0, %c0_1] : memref<32x16xf32, #tpu.memory_space<vmem>>, vector<32x16xf32>
    %c0_2 = arith.constant 0 : index
    %c0_3 = arith.constant 0 : index
    %4 = vector.load %arg2[%c0_2, %c0_3] : memref<16x128xf32, #tpu.memory_space<vmem>>, vector<16x128xf32>
    %cst = arith.constant dense<0.000000e+00> : vector<32x128xf32>
    %5 = tpu.matmul %3, %4, %cst {dimension_numbers = #tpu.dot_dimension_numbers<[1], [0], [0], [1], [0, 0, 1, 1], [], []>} : vector<32x16xf32>, vector<16x128xf32>, vector<32x128xf32> -> vector<32x128xf32>
    %c0_4 = arith.constant 0 : index
    %c0_5 = arith.constant 0 : index
    %6 = vector.load %arg3[%c0_4, %c0_5] : memref<1x128xf32, #tpu.memory_space<vmem>>, vector<1x128xf32>
    %cst_6 = arith.constant dense<0.000000e+00> : vector<128xf32>
    %7 = vector.multi_reduction <add>, %5, %cst_6 [0] : vector<32x128xf32> to vector<128xf32>
    %8 = vector.shape_cast %7 : vector<128xf32> to vector<1x128xf32>
    %9 = arith.addf %6, %8 : vector<1x128xf32>
    %c0_7 = arith.constant 0 : index
    %c0_8 = arith.constant 0 : index
    %10 = vector.load %arg3[%c0_7, %c0_8] : memref<1x128xf32, #tpu.memory_space<vmem>>, vector<1x128xf32>
    tpu.vector_store %arg3[%c0_7, %c0_8], %9 {strides = array<i32>} : memref<1x128xf32, #tpu.memory_space<vmem>>, vector<1x128xf32>,
    %c0_9 = arith.constant 0 : index
    %c0_10 = arith.constant 0 : index
    %11 = vector.load %arg4[%c0_9, %c0_10] : memref<1x128xf32, #tpu.memory_space<vmem>>, vector<1x128xf32>
    %12 = arith.mulf %5, %5 : vector<32x128xf32>
    %cst_11 = arith.constant dense<0.000000e+00> : vector<128xf32>
    %13 = vector.multi_reduction <add>, %12, %cst_11 [0] : vector<32x128xf32> to vector<128xf32>
    %14 = vector.shape_cast %13 : vector<128xf32> to vector<1x128xf32>
    %15 = arith.addf %11, %14 : vector<1x128xf32>
    %c0_12 = arith.constant 0 : index
    %c0_13 = arith.constant 0 : index
    %16 = vector.load %arg4[%c0_12, %c0_13] : memref<1x128xf32, #tpu.memory_space<vmem>>, vector<1x128xf32>
    tpu.vector_store %arg4[%c0_12, %c0_13], %15 {strides = array<i32>} : memref<1x128xf32, #tpu.memory_space<vmem>>, vector<1x128xf32>,
    return
  }
  func.func @transform_0(%arg0: i32) -> (i32, i32) {
    %c0_i32 = arith.constant 0 : i32
    %c0_i32_0 = arith.constant 0 : i32
    return %arg0, %c0_i32 : i32, i32
  }
  func.func @transform_1(%arg0: i32) -> (i32, i32) {
    %c0_i32 = arith.constant 0 : i32
    %c0_i32_0 = arith.constant 0 : i32
    %c0_i32_1 = arith.constant 0 : i32
    return %c0_i32, %c0_i32_0 : i32, i32
  }
  func.func @transform_2(%arg0: i32) -> (i32, i32) {
    %c0_i32 = arith.constant 0 : i32
    %c0_i32_0 = arith.constant 0 : i32
    %c0_i32_1 = arith.constant 0 : i32
    return %c0_i32, %c0_i32_0 : i32, i32
  }
  func.func @transform_3(%arg0: i32) -> (i32, i32) {
    %c0_i32 = arith.constant 0 : i32
    %c0_i32_0 = arith.constant 0 : i32
    %c0_i32_1 = arith.constant 0 : i32
    return %c0_i32, %c0_i32_0 : i32, i32
  }
}

module attributes {stable_mosaic.version = 11 : i64} {
  func.func @_deconv_bn_gelu_kernel(%arg0: i32, %arg1: memref<32x16xf32, #tpu.memory_space<vmem>>, %arg2: memref<16x128xf32, #tpu.memory_space<vmem>>, %arg3: memref<1x128xf32, #tpu.memory_space<vmem>>, %arg4: memref<1x128xf32, #tpu.memory_space<vmem>>, %arg5: memref<32x128xf32, #tpu.memory_space<vmem>>) attributes {dimension_semantics = [#tpu.dimension_semantics<parallel>], iteration_bounds = array<i64: 4>, scalar_prefetch = 0 : i64, scratch_operands = 0 : i64, tpu.core_type = #tpu.core_type<tc>, window_params = [{transform_indices = @transform_0, window_bounds = array<i64: 32, 16>}, {pipeline_mode = #tpu.pipeline_mode<synchronous>, transform_indices = @transform_1, window_bounds = array<i64: 16, 128>}, {pipeline_mode = #tpu.pipeline_mode<synchronous>, transform_indices = @transform_2, window_bounds = array<i64: 1, 128>}, {pipeline_mode = #tpu.pipeline_mode<synchronous>, transform_indices = @transform_3, window_bounds = array<i64: 1, 128>}, {transform_indices = @transform_4, window_bounds = array<i64: 32, 128>}]} {
    %c0 = arith.constant 0 : index
    %c0_0 = arith.constant 0 : index
    %0 = vector.load %arg1[%c0, %c0_0] : memref<32x16xf32, #tpu.memory_space<vmem>>, vector<32x16xf32>
    %c0_1 = arith.constant 0 : index
    %c0_2 = arith.constant 0 : index
    %1 = vector.load %arg2[%c0_1, %c0_2] : memref<16x128xf32, #tpu.memory_space<vmem>>, vector<16x128xf32>
    %cst = arith.constant dense<0.000000e+00> : vector<32x128xf32>
    %2 = tpu.matmul %0, %1, %cst {dimension_numbers = #tpu.dot_dimension_numbers<[1], [0], [0], [1], [0, 0, 1, 1], [], []>} : vector<32x16xf32>, vector<16x128xf32>, vector<32x128xf32> -> vector<32x128xf32>
    %c0_3 = arith.constant 0 : index
    %c0_4 = arith.constant 0 : index
    %3 = vector.load %arg3[%c0_3, %c0_4] : memref<1x128xf32, #tpu.memory_space<vmem>>, vector<1x128xf32>
    %4 = vector.broadcast %3 : vector<1x128xf32> to vector<32x128xf32>
    %5 = arith.mulf %2, %4 : vector<32x128xf32>
    %c0_5 = arith.constant 0 : index
    %c0_6 = arith.constant 0 : index
    %6 = vector.load %arg4[%c0_5, %c0_6] : memref<1x128xf32, #tpu.memory_space<vmem>>, vector<1x128xf32>
    %7 = vector.broadcast %6 : vector<1x128xf32> to vector<32x128xf32>
    %8 = arith.addf %5, %7 : vector<32x128xf32>
    %cst_7 = arith.constant 5.000000e-01 : f32
    %9 = vector.broadcast %cst_7 : f32 to vector<32x128xf32>
    %10 = arith.mulf %9, %8 : vector<32x128xf32>
    %cst_8 = arith.constant 0.707106769 : f32
    %11 = vector.broadcast %cst_8 : f32 to vector<32x128xf32>
    %12 = arith.mulf %8, %11 : vector<32x128xf32>
    %13 = math.erf %12 : vector<32x128xf32>
    %cst_9 = arith.constant 1.000000e+00 : f32
    %14 = vector.broadcast %cst_9 : f32 to vector<32x128xf32>
    %15 = arith.addf %14, %13 : vector<32x128xf32>
    %16 = arith.mulf %10, %15 : vector<32x128xf32>
    %c0_10 = arith.constant 0 : index
    %c0_11 = arith.constant 0 : index
    %17 = vector.load %arg5[%c0_10, %c0_11] : memref<32x128xf32, #tpu.memory_space<vmem>>, vector<32x128xf32>
    tpu.vector_store %arg5[%c0_10, %c0_11], %16 {strides = array<i32>} : memref<32x128xf32, #tpu.memory_space<vmem>>, vector<32x128xf32>,
    return
  }
  func.func @transform_0(%arg0: i32) -> (i32, i32) {
    %c0_i32 = arith.constant 0 : i32
    %c0_i32_0 = arith.constant 0 : i32
    return %arg0, %c0_i32 : i32, i32
  }
  func.func @transform_1(%arg0: i32) -> (i32, i32) {
    %c0_i32 = arith.constant 0 : i32
    %c0_i32_0 = arith.constant 0 : i32
    %c0_i32_1 = arith.constant 0 : i32
    return %c0_i32, %c0_i32_0 : i32, i32
  }
  func.func @transform_2(%arg0: i32) -> (i32, i32) {
    %c0_i32 = arith.constant 0 : i32
    %c0_i32_0 = arith.constant 0 : i32
    %c0_i32_1 = arith.constant 0 : i32
    return %c0_i32, %c0_i32_0 : i32, i32
  }
  func.func @transform_3(%arg0: i32) -> (i32, i32) {
    %c0_i32 = arith.constant 0 : i32
    %c0_i32_0 = arith.constant 0 : i32
    %c0_i32_1 = arith.constant 0 : i32
    return %c0_i32, %c0_i32_0 : i32, i32
  }
  func.func @transform_4(%arg0: i32) -> (i32, i32) {
    %c0_i32 = arith.constant 0 : i32
    %c0_i32_0 = arith.constant 0 : i32
    return %arg0, %c0_i32 : i32, i32
  }
}

</mosaic_0001>

<llo_original>
// kernel: mul.4
$region0: #{mul.4}
  %s0 = inlined_call_operand.hbm [shape: f32[4,2,2,8], index: 0, kind: input, shape index: {}]
  %s1 = inlined_call_operand.vmem [shape: f32[4,32], index: 1, kind: output, shape index: {}]
  $region1: #{mul.4} parent=0
    #allocation0 [shape = 'u8[8192]{0}', space=vmem, size = 0x2000, scoped, tag = 'operand span for operand 0']
    #allocation1 [shape = 's32[1]{0}', space=sflag, size = 0x4, scoped, tag = 'scoped memory for mul.4']
    #allocation2 [shape = 'u8[4096]{0}', space=vmem, size = 0x1000, scoped, tag = 'scoped mem for output reshape']
    #allocation3 [shape = 'u8[32768]{0}', space=vmem, size = 0x8000, scoped, tag = 'scoped mem for input reshape']
    %2 = vsyncpa [#allocation1], 0
    %s4 = ssub.s32 256, 256
    %5 = vsyncadd [#allocation1], %s4
    %s7 = sshll.u32 [#allocation0], 4
    %s8 = int_to_ptr.vmem [resolvable:$true] %s7
    %10 = dma.hbm_to_vmem [thread:$0]  %s0, 256, %s8, [#allocation1]
    %11 = dma.done [#allocation1], 256
    %s13 = sshll.u32 1, 2
    %s14 = ssub.s32 %s13, 1
    %s15 = smul.addr 2, 7
    %s16 = scalar_lea.vmem [#allocation0], %s15
    %v17 = vld [vmem:[%s16] sm:%s14]
    %s18 = scalar_lea.vmem [#allocation3], 56
    %19 = vst [vmem:[%s18] sm:%s14] %v17
    %s20 = smul.addr 2, 6
    %s21 = scalar_lea.vmem [#allocation0], %s20
    %v22 = vld [vmem:[%s21] sm:%s14]
    %s23 = scalar_lea.vmem [#allocation3], 48
    %24 = vst [vmem:[%s23] sm:%s14] %v22
    %s25 = smul.addr 2, 5
    %s26 = scalar_lea.vmem [#allocation0], %s25
    %v27 = vld [vmem:[%s26] sm:%s14]
    %s28 = scalar_lea.vmem [#allocation3], 40
    %29 = vst [vmem:[%s28] sm:%s14] %v27
    %s30 = smul.addr 2, 4
    %s31 = scalar_lea.vmem [#allocation0], %s30
    %v32 = vld [vmem:[%s31] sm:%s14]
    %s33 = scalar_lea.vmem [#allocation3], 32
    %34 = vst [vmem:[%s33] sm:%s14] %v32
    %s35 = smul.addr 2, 3
    %s36 = scalar_lea.vmem [#allocation0], %s35
    %v37 = vld [vmem:[%s36] sm:%s14]
    %s38 = scalar_lea.vmem [#allocation3], 24
    %39 = vst [vmem:[%s38] sm:%s14] %v37
    %s40 = smul.addr 2, 2
    %s41 = scalar_lea.vmem [#allocation0], %s40
    %v42 = vld [vmem:[%s41] sm:%s14]
    %s43 = scalar_lea.vmem [#allocation3], 16
    %44 = vst [vmem:[%s43] sm:%s14] %v42
    %s45 = scalar_lea.vmem [#allocation0], 2
    %v46 = vld [vmem:[%s45] sm:%s14]
    %s47 = scalar_lea.vmem [#allocation3], 8
    %48 = vst [vmem:[%s47] sm:%s14] %v46
    %v49 = vld [vmem:[#allocation0] sm:%s14]
    %50 = vst [vmem:[#allocation3] sm:%s14] %v49
    %s51 = smov 3
    %v52 = vld [vmem:[#allocation3] ss:$16 sm:%s51]
    %s53 = smov 12
    %v54 = vld [vmem:[#allocation3] ss:$16 sm:%s53]
    %vm55 = vcmask 1043458
    %v56 = vsel %vm55, %v54, %v52
    %vm57 = vcmask 64512
    %58 = vst.msk [vmem:[#allocation2] sm:$0xf] %vm57, %v56
    %s59 = scalar_lea.vmem [#allocation3], 9
    %s60 = smov 3
    %v61 = vld [vmem:[%s59] ss:$16 sm:%s60]
    %s62 = scalar_lea.vmem [#allocation3], 9
    %s63 = smov 12
    %v64 = vld [vmem:[%s62] ss:$16 sm:%s63]
    %vm65 = vcmask 1043458
    %v66 = vsel %vm65, %v64, %v61
    %67 = vrot.lane.b32.xlu0 %v66, 24
    %v68 = vpop.permute.xlu0 %67
    %vm69 = vcmask 261312
    %70 = vst.msk [vmem:[#allocation2] sm:$0xf] %vm69, %v68
    %s71 = scalar_lea.vmem [#allocation3], 8
    %s72 = smov 3
    %v73 = vld [vmem:[%s71] ss:$16 sm:%s72]
    %s74 = scalar_lea.vmem [#allocation3], 8
    %s75 = smov 12
    %v76 = vld [vmem:[%s74] ss:$16 sm:%s75]
    %vm77 = vcmask 1043458
    %v78 = vsel %vm77, %v76, %v73
    %79 = vrot.lane.b32.xlu0 %v78, 16
    %v80 = vpop.permute.xlu0 %79
    %vm81 = vcmask 195712
    %82 = vst.msk [vmem:[#allocation2] sm:$0xf] %vm81, %v80
    %s83 = scalar_lea.vmem [#allocation3], 1
    %s84 = smov 3
    %v85 = vld [vmem:[%s83] ss:$16 sm:%s84]
    %s86 = scalar_lea.vmem [#allocation3], 1
    %s87 = smov 12
    %v88 = vld [vmem:[%s86] ss:$16 sm:%s87]
    %vm89 = vcmask 1043458
    %v90 = vsel %vm89, %v88, %v85
    %91 = vrot.lane.b32.xlu0 %v90, 8
    %v92 = vpop.permute.xlu0 %91
    %vm93 = vcmask 130112
    %94 = vst.msk [vmem:[#allocation2] sm:$0xf] %vm93, %v92
    %s96 = sshll.u32 1, 4
    %s97 = ssub.s32 %s96, 1
    %v99 = vld [vmem:[#allocation2] sm:%s97]
    %s100 = sshll.u32 1, 4
    %s101 = ssub.s32 %s100, 1
    %102 = vst [vmem:[%s1] sm:%s101] %v99
    %103 = vsyncpa [#allocation1], 1

// kernel: squeeze.2
$region0: #{squeeze.2}
  %s0 = inlined_call_operand.vmem [shape: f32[128], index: 0, kind: input, shape index: {}]
  %s1 = inlined_call_operand.vmem [shape: f32[16,8], index: 1, kind: output, shape index: {}]
  $region1: #{squeeze.2} parent=0
    #allocation0 [shape = 'u8[4096]{0}', space=vmem, size = 0x1000, scoped, tag = 'scoped mem for input reshape']
    %s3 = sshll.u32 1, 1
    %s4 = ssub.s32 %s3, 1
    %v5 = vld [vmem:[%s0] sm:%s4]
    %6 = vst [vmem:[#allocation0] sm:%s4] %v5
    %v7 = vld [vmem:[#allocation0] sm:$0x1]
    %vm8 = vcmask 64512
    %9 = vst.msk [vmem:[%s1] sm:$0x1] %vm8, %v7
    %v10 = vld [vmem:[#allocation0] sm:$0x1]
    %11 = vrot.lane.b32.xlu0 %v10, 120
    %v12 = vpop.permute.xlu0 %11
    %vm13 = vcmask 64512
    %s14 = scalar_lea.vmem %s1, 1
    %15 = vst.msk [vmem:[%s14] sm:$0x1] %vm13, %v12
    %v16 = vld [vmem:[#allocation0] sm:$0x1]
    %17 = vrot.lane.b32.xlu0 %v16, 112
    %v18 = vpop.permute.xlu0 %17
    %vm19 = vcmask 64512
    %s20 = scalar_lea.vmem %s1, 2
    %21 = vst.msk [vmem:[%s20] sm:$0x1] %vm19, %v18
    %v22 = vld [vmem:[#allocation0] sm:$0x1]
    %23 = vrot.lane.b32.xlu0 %v22, 104
    %v24 = vpop.permute.xlu0 %23
    %vm25 = vcmask 64512
    %s26 = scalar_lea.vmem %s1, 3
    %27 = vst.msk [vmem:[%s26] sm:$0x1] %vm25, %v24
    %v28 = vld [vmem:[#allocation0] sm:$0x1]
    %29 = vrot.lane.b32.xlu0 %v28, 96
    %v30 = vpop.permute.xlu0 %29
    %vm31 = vcmask 64512
    %s32 = scalar_lea.vmem %s1, 4
    %33 = vst.msk [vmem:[%s32] sm:$0x1] %vm31, %v30
    %v34 = vld [vmem:[#allocation0] sm:$0x1]
    %35 = vrot.lane.b32.xlu0 %v34, 88
    %v36 = vpop.permute.xlu0 %35
    %vm37 = vcmask 64512
    %s38 = scalar_lea.vmem %s1, 5
    %39 = vst.msk [vmem:[%s38] sm:$0x1] %vm37, %v36
    %v40 = vld [vmem:[#allocation0] sm:$0x1]
    %41 = vrot.lane.b32.xlu0 %v40, 80
    %v42 = vpop.permute.xlu0 %41
    %vm43 = vcmask 64512
    %s44 = scalar_lea.vmem %s1, 6
    %45 = vst.msk [vmem:[%s44] sm:$0x1] %vm43, %v42
    %v46 = vld [vmem:[#allocation0] sm:$0x1]
    %47 = vrot.lane.b32.xlu0 %v46, 72
    %v48 = vpop.permute.xlu0 %47
    %vm49 = vcmask 64512
    %s50 = scalar_lea.vmem %s1, 7
    %51 = vst.msk [vmem:[%s50] sm:$0x1] %vm49, %v48
    %v52 = vld [vmem:[#allocation0] sm:$0x1]
    %53 = vrot.lane.b32.xlu0 %v52, 64
    %v54 = vpop.permute.xlu0 %53
    %vm55 = vcmask 64512
    %s56 = scalar_lea.vmem %s1, 8
    %57 = vst.msk [vmem:[%s56] sm:$0x1] %vm55, %v54
    %v58 = vld [vmem:[#allocation0] sm:$0x1]
    %59 = vrot.lane.b32.xlu0 %v58, 56
    %v60 = vpop.permute.xlu0 %59
    %vm61 = vcmask 64512
    %s62 = scalar_lea.vmem %s1, 9
    %63 = vst.msk [vmem:[%s62] sm:$0x1] %vm61, %v60
    %v64 = vld [vmem:[#allocation0] sm:$0x1]
    %65 = vrot.lane.b32.xlu0 %v64, 48
    %v66 = vpop.permute.xlu0 %65
    %vm67 = vcmask 64512
    %s68 = scalar_lea.vmem %s1, 10
    %69 = vst.msk [vmem:[%s68] sm:$0x1] %vm67, %v66
    %v70 = vld [vmem:[#allocation0] sm:$0x1]
    %71 = vrot.lane.b32.xlu0 %v70, 40
    %v72 = vpop.permute.xlu0 %71
    %vm73 = vcmask 64512
    %s74 = scalar_lea.vmem %s1, 11
    %75 = vst.msk [vmem:[%s74] sm:$0x1] %vm73, %v72
    %v76 = vld [vmem:[#allocation0] sm:$0x1]
    %77 = vrot.lane.b32.xlu0 %v76, 32
    %v78 = vpop.permute.xlu0 %77
    %vm79 = vcmask 64512
    %s80 = scalar_lea.vmem %s1, 12
    %81 = vst.msk [vmem:[%s80] sm:$0x1] %vm79, %v78
    %v82 = vld [vmem:[#allocation0] sm:$0x1]
    %83 = vrot.lane.b32.xlu0 %v82, 24
    %v84 = vpop.permute.xlu0 %83
    %vm85 = vcmask 64512
    %s86 = scalar_lea.vmem %s1, 13
    %87 = vst.msk [vmem:[%s86] sm:$0x1] %vm85, %v84
    %v88 = vld [vmem:[#allocation0] sm:$0x1]
    %89 = vrot.lane.b32.xlu0 %v88, 16
    %v90 = vpop.permute.xlu0 %89
    %vm91 = vcmask 64512
    %s92 = scalar_lea.vmem %s1, 14
    %93 = vst.msk [vmem:[%s92] sm:$0x1] %vm91, %v90
    %v94 = vld [vmem:[#allocation0] sm:$0x1]
    %95 = vrot.lane.b32.xlu0 %v94, 8
    %v96 = vpop.permute.xlu0 %95
    %vm97 = vcmask 64512
    %s98 = scalar_lea.vmem %s1, 15
    %99 = vst.msk [vmem:[%s98] sm:$0x1] %vm97, %v96

// kernel: tile.18
$region0: #{tile.18}
  #allocation0 [shape = 's32[1]{0}', space=sflag, size = 0x4, scoped, tag = 'scoped memory for tile.18']
  %s0 = inlined_call_operand.vmem [shape: f32[8], index: 0, kind: input, shape index: {}]
  %s1 = inlined_call_operand.vmem [shape: f32[16,8], index: 1, kind: output, shape index: {}]
  // Predicated region
  $region2: #{tile.18} parent=0 // pred_check
    _
  $region3: #{tile.18} parent=0 // pred_check_branch
    %3 = sbr.rel (0) target = $region5
  $region4: #{tile.18} parent=0 // pred_region
    _
  $region5: #{tile.18} parent=0 // pred_fallthru
    _
  %v4 = vld [vmem:[%s0] ss:$0 sm:$0xff]
  %5 = vst [vmem:[%s1] sm:$0xff] %v4
  %s6 = scalar_lea.vmem %s1, 8
  %7 = vst [vmem:[%s6] sm:$0xff] %v4

// kernel: tile.19
$region0: #{tile.19}
  %s0 = inlined_call_operand.vmem [shape: f32[16,8], index: 0, kind: input, shape index: {}]
  %s1 = inlined_call_operand.vmem [shape: f32[1,128], index: 1, kind: output, shape index: {}]
  $region1: #{tile.19} parent=0
    #allocation0 [shape = 'u8[4096]{0}', space=vmem, size = 0x1000, scoped, tag = 'scoped mem for output reshape']
    %v2 = vld [vmem:[%s0] sm:$0x1]
    %vm3 = vcmask 64512
    %4 = vst.msk [vmem:[#allocation0] sm:$0x1] %vm3, %v2
    %s5 = scalar_lea.vmem %s0, 15
    %v6 = vld [vmem:[%s5] sm:$0x1]
    %7 = vrot.lane.b32.xlu0 %v6, 120
    %v8 = vpop.permute.xlu0 %7
    %vm9 = vcmask 1048512
    %10 = vst.msk [vmem:[#allocation0] sm:$0x1] %vm9, %v8
    %s11 = scalar_lea.vmem %s0, 14
    %v12 = vld [vmem:[%s11] sm:$0x1]
    %13 = vrot.lane.b32.xlu0 %v12, 112
    %v14 = vpop.permute.xlu0 %13
    %vm15 = vcmask 982912
    %16 = vst.msk [vmem:[#allocation0] sm:$0x1] %vm15, %v14
    %s17 = scalar_lea.vmem %s0, 13
    %v18 = vld [vmem:[%s17] sm:$0x1]
    %19 = vrot.lane.b32.xlu0 %v18, 104
    %v20 = vpop.permute.xlu0 %19
    %vm21 = vcmask 917312
    %22 = vst.msk [vmem:[#allocation0] sm:$0x1] %vm21, %v20
    %s23 = scalar_lea.vmem %s0, 12
    %v24 = vld [vmem:[%s23] sm:$0x1]
    %25 = vrot.lane.b32.xlu0 %v24, 96
    %v26 = vpop.permute.xlu0 %25
    %vm27 = vcmask 851712
    %28 = vst.msk [vmem:[#allocation0] sm:$0x1] %vm27, %v26
    %s29 = scalar_lea.vmem %s0, 11
    %v30 = vld [vmem:[%s29] sm:$0x1]
    %31 = vrot.lane.b32.xlu0 %v30, 88
    %v32 = vpop.permute.xlu0 %31
    %vm33 = vcmask 786112
    %34 = vst.msk [vmem:[#allocation0] sm:$0x1] %vm33, %v32
    %s35 = scalar_lea.vmem %s0, 10
    %v36 = vld [vmem:[%s35] sm:$0x1]
    %37 = vrot.lane.b32.xlu0 %v36, 80
    %v38 = vpop.permute.xlu0 %37
    %vm39 = vcmask 720512
    %40 = vst.msk [vmem:[#allocation0] sm:$0x1] %vm39, %v38
    %s41 = scalar_lea.vmem %s0, 9
    %v42 = vld [vmem:[%s41] sm:$0x1]
    %43 = vrot.lane.b32.xlu0 %v42, 72
    %v44 = vpop.permute.xlu0 %43
    %vm45 = vcmask 654912
    %46 = vst.msk [vmem:[#allocation0] sm:$0x1] %vm45, %v44
    %s47 = scalar_lea.vmem %s0, 8
    %v48 = vld [vmem:[%s47] sm:$0x1]
    %49 = vrot.lane.b32.xlu0 %v48, 64
    %v50 = vpop.permute.xlu0 %49
    %vm51 = vcmask 589312
    %52 = vst.msk [vmem:[#allocation0] sm:$0x1] %vm51, %v50
    %s53 = scalar_lea.vmem %s0, 7
    %v54 = vld [vmem:[%s53] sm:$0x1]
    %55 = vrot.lane.b32.xlu0 %v54, 56
    %v56 = vpop.permute.xlu0 %55
    %vm57 = vcmask 523712
    %58 = vst.msk [vmem:[#allocation0] sm:$0x1] %vm57, %v56
    %s59 = scalar_lea.vmem %s0, 6
    %v60 = vld [vmem:[%s59] sm:$0x1]
    %61 = vrot.lane.b32.xlu0 %v60, 48
    %v62 = vpop.permute.xlu0 %61
    %vm63 = vcmask 458112
    %64 = vst.msk [vmem:[#allocation0] sm:$0x1] %vm63, %v62
    %s65 = scalar_lea.vmem %s0, 5
    %v66 = vld [vmem:[%s65] sm:$0x1]
    %67 = vrot.lane.b32.xlu0 %v66, 40
    %v68 = vpop.permute.xlu0 %67
    %vm69 = vcmask 392512
    %70 = vst.msk [vmem:[#allocation0] sm:$0x1] %vm69, %v68
    %s71 = scalar_lea.vmem %s0, 4
    %v72 = vld [vmem:[%s71] sm:$0x1]
    %73 = vrot.lane.b32.xlu0 %v72, 32
    %v74 = vpop.permute.xlu0 %73
    %vm75 = vcmask 326912
    %76 = vst.msk [vmem:[#allocation0] sm:$0x1] %vm75, %v74
    %s77 = scalar_lea.vmem %s0, 3
    %v78 = vld [vmem:[%s77] sm:$0x1]
    %79 = vrot.lane.b32.xlu0 %v78, 24
    %v80 = vpop.permute.xlu0 %79
    %vm81 = vcmask 261312
    %82 = vst.msk [vmem:[#allocation0] sm:$0x1] %vm81, %v80
    %s83 = scalar_lea.vmem %s0, 2
    %v84 = vld [vmem:[%s83] sm:$0x1]
    %85 = vrot.lane.b32.xlu0 %v84, 16
    %v86 = vpop.permute.xlu0 %85
    %vm87 = vcmask 195712
    %88 = vst.msk [vmem:[#allocation0] sm:$0x1] %vm87, %v86
    %s89 = scalar_lea.vmem %s0, 1
    %v90 = vld [vmem:[%s89] sm:$0x1]
    %91 = vrot.lane.b32.xlu0 %v90, 8
    %v92 = vpop.permute.xlu0 %91
    %vm93 = vcmask 130112
    %94 = vst.msk [vmem:[#allocation0] sm:$0x1] %vm93, %v92
    %s96 = sshll.u32 1, 1
    %s97 = ssub.s32 %s96, 1
    %v99 = vld [vmem:[#allocation0] sm:%s97]
    %s100 = sshll.u32 1, 1
    %s101 = ssub.s32 %s100, 1
    %102 = vst [vmem:[%s1] sm:%s101] %v99

// kernel: deconv_block.2
$region0: #{deconv_block.2}
  #allocation0 [shape = 'u32[]', space=smem, size = 0x4, offset = 0x4, fixed_abs, tag = 'smem constant byte address 0x4 - core index']
  #allocation1 [shape = 'u32[144,128]{1,0:T(1,128)}', space=vmem, size = 0x12000, scoped, tag = 'internal scratch']
  %s0 = inlined_call_operand.vmem [shape: f32[128,16], index: 0, kind: input, shape index: {}]
  %s1 = inlined_call_operand.vmem [shape: f32[16,128], index: 1, kind: input, shape index: {}]
  %s2 = inlined_call_operand.vmem [shape: f32[1,128], index: 2, kind: output, shape index: {0}]
  %s3 = inlined_call_operand.vmem [shape: f32[1,128], index: 3, kind: output, shape index: {1}]
  %4 = xla_tuple %s2, %s3
  %s5 = sld [smem:[#allocation0]]
  $region53: #{deconv_block.2} parent=0
    _
  %s7 = ssub.s32 1, %s5
  %s8 = scalar_select 0, %s7, %s5
  loop: start=0, step=1, limit=6
  $region2: #{deconv_block.2} parent=0 // loop_pre_header
    _
  $region3: #{deconv_block.2} parent=0 // loop_header
    %s10 = sphi 0, %s14
    %p11 = scmp.ge.s32.totalorder %s10, 6
    %s20 = sphi 0, %s22
    %s23 = sphi 0, %s20
    %s24 = sphi 0, %s23
    %s40 = sphi 0, %s24
    %s44 = sphi 0, %s44
    %s46 = sphi 0, %s44
    %s47 = sphi 0, %s46
    %s61 = sphi 0, %s47
    %s65 = sphi 0, %s65
    %s67 = sphi 0, %s65
    %s68 = sphi 0, %s67
    %s82 = sphi 0, %s68
    %s86 = sphi 0, %s86
    %s88 = sphi 0, %s86
    %s89 = sphi 0, %s88
    %s103 = sphi 0, %s89
  $region4: #{deconv_block.2} parent=0 // loop_header_branch
    %13 = sbr.rel (%p11) target = $region8
  $region5: #{deconv_block.2} parent=0 // loop_body
    %s15 = ssub.s32 %s10, 1
    %s16 = ssub.s32 %s10, 2
    %s17 = sadd.s32 %s10, 1
    %s18 = ssub.s32 %s10, %s17
    %p19 = scmp.eq.s32.totalorder %s18, 0
    %s21 = sadd.s32 %s20, 1
    %s22 = scalar_select %p19, %s20, %s21
    %p25 = pneg %p19
    %p26 = scmp.eq.s32.totalorder %s10, 3
    %p27 = por %p25, %p26
    %p28 = scmp.ne.s32.totalorder %s20, %s23
    %p29 = scmp.eq.s32.totalorder %s10, 0
    %p30 = por %p28, %p29
    %p31 = scmp.ne.s32.totalorder %s20, %s23
    %p32 = scmp.eq.s32.totalorder %s15, 3
    %p33 = por %p31, %p32
    %p34 = scmp.ne.s32.totalorder %s23, %s24
    %p35 = scmp.eq.s32.totalorder %s15, 0
    %p36 = por %p34, %p35
    %p37 = scmp.ne.s32.totalorder %s23, %s24
    %p38 = scmp.eq.s32.totalorder %s16, 3
    %p39 = por %p37, %p38
    %p41 = scmp.ne.s32.totalorder %s24, %s40
    %p42 = scmp.eq.s32.totalorder %s16, 0
    %p43 = por %p41, %p42
    %s45 = sadd.s32 %s44, 1
    %p48 = scmp.eq.s32.totalorder %s10, 3
    %p49 = scmp.ne.s32.totalorder %s44, %s46
    %p50 = scmp.eq.s32.totalorder %s10, 0
    %p51 = por %p49, %p50
    %p52 = scmp.ne.s32.totalorder %s44, %s46
    %p53 = scmp.eq.s32.totalorder %s15, 3
    %p54 = por %p52, %p53
    %p55 = scmp.ne.s32.totalorder %s46, %s47
    %p56 = scmp.eq.s32.totalorder %s15, 0
    %p57 = por %p55, %p56
    %p58 = scmp.ne.s32.totalorder %s46, %s47
    %p59 = scmp.eq.s32.totalorder %s16, 3
    %p60 = por %p58, %p59
    %p62 = scmp.ne.s32.totalorder %s47, %s61
    %p63 = scmp.eq.s32.totalorder %s16, 0
    %p64 = por %p62, %p63
    %s66 = sadd.s32 %s65, 1
    %p69 = scmp.eq.s32.totalorder %s10, 3
    %p70 = scmp.ne.s32.totalorder %s65, %s67
    %p71 = scmp.eq.s32.totalorder %s10, 0
    %p72 = por %p70, %p71
    %p73 = scmp.ne.s32.totalorder %s65, %s67
    %p74 = scmp.eq.s32.totalorder %s15, 3
    %p75 = por %p73, %p74
    %p76 = scmp.ne.s32.totalorder %s67, %s68
    %p77 = scmp.eq.s32.totalorder %s15, 0
    %p78 = por %p76, %p77
    %p79 = scmp.ne.s32.totalorder %s67, %s68
    %p80 = scmp.eq.s32.totalorder %s16, 3
    %p81 = por %p79, %p80
    %p83 = scmp.ne.s32.totalorder %s68, %s82
    %p84 = scmp.eq.s32.totalorder %s16, 0
    %p85 = por %p83, %p84
    %s87 = sadd.s32 %s86, 1
    %p90 = scmp.eq.s32.totalorder %s10, 3
    %p91 = scmp.ne.s32.totalorder %s86, %s88
    %p92 = scmp.eq.s32.totalorder %s10, 0
    %p93 = por %p91, %p92
    %p94 = scmp.ne.s32.totalorder %s86, %s88
    %p95 = scmp.eq.s32.totalorder %s15, 3
    %p96 = por %p94, %p95
    %p97 = scmp.ne.s32.totalorder %s88, %s89
    %p98 = scmp.eq.s32.totalorder %s15, 0
    %p99 = por %p97, %p98
    %p100 = scmp.ne.s32.totalorder %s88, %s89
    %p101 = scmp.eq.s32.totalorder %s16, 3
    %p102 = por %p100, %p101
    %p104 = scmp.ne.s32.totalorder %s89, %s103
    %p105 = scmp.eq.s32.totalorder %s16, 0
    %p106 = por %p104, %p105
    %p107 = scmp.le.s32.totalorder 1, %s10
    %p108 = scmp.lt.s32.totalorder %s10, 5
    %p109 = pnand %p107, %p108
    %p110 = pneg %p109
    // Predicated region
    $region9: #{deconv_block.2} parent=5 // pred_check
      _
    $region10: #{deconv_block.2} parent=5 // pred_check_branch
      %112 = sbr.rel (%p109) target = $region12
    $region11: #{deconv_block.2} parent=5 // pred_region
      %s113 = ssub.s32 %s10, 1
      // Predicated region
      $region13: #{deconv_block.2} parent=11 // pred_check
        %p114 = pneg %p57
      $region14: #{deconv_block.2} parent=11 // pred_check_branch
        %116 = sbr.rel (%p114) target = $region16
      $region15: #{deconv_block.2} parent=11 // pred_region
        _
      $region16: #{deconv_block.2} parent=11 // pred_fallthru
        _
    $region12: #{deconv_block.2} parent=5 // pred_fallthru
      _
    %p117 = scmp.lt.s32.totalorder %s10, 4
    // Predicated region
    $region17: #{deconv_block.2} parent=5 // pred_check
      %p118 = pneg %p117
    $region18: #{deconv_block.2} parent=5 // pred_check_branch
      %120 = sbr.rel (%p118) target = $region20
    $region19: #{deconv_block.2} parent=5 // pred_region
      // Predicated region
      $region21: #{deconv_block.2} parent=19 // pred_check
        %p121 = pneg %p30
      $region22: #{deconv_block.2} parent=19 // pred_check_branch
        %123 = sbr.rel (%p121) target = $region24
      $region23: #{deconv_block.2} parent=19 // pred_region
        %s124 = smul.u32 4, %s10
        %p125 = scmp.lt.s32.totalorder %s124, 15
        %s126 = scalar_select %p125, %s124, 15
        %s127 = smul.addr %s126, 8
        %s128 = scalar_lea.vmem %s0, %s127
        %s129 = smul.u32 4, %s10
      $region24: #{deconv_block.2} parent=19 // pred_fallthru
        _
    $region20: #{deconv_block.2} parent=5 // pred_fallthru
      _
    %p130 = scmp.le.s32.totalorder 1, %s10
    %p131 = scmp.lt.s32.totalorder %s10, 5
    %p132 = pnand %p130, %p131
    %p133 = pneg %p132
    // Predicated region
    $region25: #{deconv_block.2} parent=5 // pred_check
      _
    $region26: #{deconv_block.2} parent=5 // pred_check_branch
      %135 = sbr.rel (%p132) target = $region28
    $region27: #{deconv_block.2} parent=5 // pred_region
      %s136 = ssub.s32 %s10, 1
      %s137 = smul.u32 4, %s15
      %p138 = scmp.lt.s32.totalorder %s137, 15
      %s139 = scalar_select %p138, %s137, 15
      %s140 = smul.addr %s139, 8
      %s141 = scalar_lea.vmem %s0, %s140
      %p142 = pneg %p36
      %p143 = pneg %p33
      %p144 = pneg %p57
      %p145 = pneg %p54
      %p146 = pneg %p78
      %p147 = pneg %p75
      %p148 = pneg %p99
      %p149 = pneg %p96
      %s150 = smul.u32 4, %s15
      %p151 = scmp.lt.s32.totalorder %s150, 15
      %s152 = scalar_select %p151, %s150, 15
      %s153 = smul.addr %s152, 8
      %s154 = scalar_lea.vmem %s0, %s153
      %s155 = smul.u32 4, %s15
      %p156 = scmp.eq.s32.totalorder %s15, 0
      // Predicated region
      $region29: #{deconv_block.2} parent=27 // pred_check
        %p157 = pneg %p156
      $region30: #{deconv_block.2} parent=27 // pred_check_branch
        %159 = sbr.rel (%p157) target = $region32
      $region31: #{deconv_block.2} parent=27 // pred_region
        %160 = vst [vmem:[%s2] sm:$0x1] 0.0
        %161 = vst [vmem:[%s3] sm:$0x1] 0.0
      $region32: #{deconv_block.2} parent=27 // pred_fallthru
        _
      %v162 = vld [vmem:[%s154] sm:$0xff]
      %v163 = vld [vmem:[%s154 + $0x8] sm:$0xff]
      %v164 = vld [vmem:[%s154 + $0x10] sm:$0xff]
      %v165 = vld [vmem:[%s154 + $0x18] sm:$0xff]
      %v166 = vld [vmem:[%s1] sm:$0xff]
      %v167 = vld [vmem:[%s1 + $0x8] sm:$0xff]
      %vm168 = vcmask 130048
      %v170 = vsel %vm168, %v162, 0
      %v173 = vsel %vm168, %v163, 0
      %v176 = vsel %vm168, %v164, 0
      %v179 = vsel %vm168, %v165, 0
      %181 = vmatprep.subr.mxu0 0.0
      %182 = vmatpush1.msra.mxu0 0.0
      %183 = vmatprep.subr.mxu0 0.0
      %184 = vmatpush1.msra.mxu0 0.0
      %185 = vmatprep.subr.mxu0 0.0
      %186 = vmatpush1.msra.mxu0 0.0
      %187 = vmatprep.subr.mxu0 0.0
      %188 = vmatpush1.msra.mxu0 0.0
      %189 = vmatprep.subr.mxu0 0.0
      %190 = vmatpush1.msra.mxu0 0.0
      %191 = vmatprep.subr.mxu0 0.0
      %192 = vmatpush1.msra.mxu0 0.0
      %193 = vmatprep.subr.mxu0 0.0
      %194 = vmatpush1.msra.mxu0 0.0
      %195 = vmatprep.subr.mxu0 0.0
      %196 = vmatpush1.msra.mxu0 0.0
      %197 = vmatprep.subr.mxu0 0.0
      %198 = vmatpush1.msra.mxu0 0.0
      %199 = vmatprep.subr.mxu0 0.0
      %200 = vmatpush1.msra.mxu0 0.0
      %201 = vmatprep.subr.mxu0 0.0
      %202 = vmatpush1.msra.mxu0 0.0
      %203 = vmatprep.subr.mxu0 0.0
      %204 = vmatpush1.msra.mxu0 0.0
      %205 = vmatprep.subr.mxu0 0.0
      %206 = vmatpush1.msra.mxu0 0.0
      %207 = vmatprep.subr.mxu0 0.0
      %208 = vmatpush1.msra.mxu0 0.0
      %209 = vmatprep.subr.mxu0 0.0
      %210 = vmatpush1.msra.mxu0 %v167
      %211 = vmatprep.subr.mxu0 0.0
      %212 = vmatpush1.msra.mxu0 %v166
      %213 = vmatprep.subr.mxu0 0.0
      %214 = vmatpush2.msra.mxu0 0.0
      %215 = vmatprep.subr.mxu0 0.0
      %216 = vmatpush2.msra.mxu0 0.0
      %217 = vmatprep.subr.mxu0 0.0
      %218 = vmatpush2.msra.mxu0 0.0
      %219 = vmatprep.subr.mxu0 0.0
      %220 = vmatpush2.msra.mxu0 0.0
      %221 = vmatprep.subr.mxu0 0.0
      %222 = vmatpush2.msra.mxu0 0.0
      %223 = vmatprep.subr.mxu0 0.0
      %224 = vmatpush2.msra.mxu0 0.0
      %225 = vmatprep.subr.mxu0 0.0
      %226 = vmatpush2.msra.mxu0 0.0
      %227 = vmatprep.subr.mxu0 0.0
      %228 = vmatpush2.msra.mxu0 0.0
      %229 = vmatprep.subr.mxu0 0.0
      %230 = vmatpush2.msra.mxu0 0.0
      %231 = vmatprep.subr.mxu0 0.0
      %232 = vmatpush2.msra.mxu0 0.0
      %233 = vmatprep.subr.mxu0 0.0
      %234 = vmatpush2.msra.mxu0 0.0
      %235 = vmatprep.subr.mxu0 0.0
      %236 = vmatpush2.msra.mxu0 0.0
      %237 = vmatprep.subr.mxu0 0.0
      %238 = vmatpush2.msra.mxu0 0.0
      %239 = vmatprep.subr.mxu0 0.0
      %240 = vmatpush2.msra.mxu0 0.0
      %241 = vmatprep.subr.mxu0 0.0
      %242 = vmatpush2.msra.mxu0 0.0
      %243 = vmatprep.subr.mxu0 0.0
      %244 = vmatpush2.msra.mxu0 0.0
      %245 = vmatprep.mubr.f32.mxu0 0.0
      %246 = vmatmul.mubr.f32.gmra.mxu0 %v170
      %v247 = vpop.f32.mrf.mxu0
      %v248 = vadd.f32 0.0, %v247
      %v249 = vpop.f32.mrf.mxu0
      %250 = vmatprep.mubr.f32.mxu0 0.0
      %251 = vmatmul.mubr.f32.gmra.mxu0 %v173
      %v252 = vpop.f32.mrf.mxu0
      %v253 = vadd.f32 0.0, %v252
      %v254 = vpop.f32.mrf.mxu0
      %255 = vmatprep.mubr.f32.mxu0 0.0
      %256 = vmatmul.mubr.f32.gmra.mxu0 %v176
      %v257 = vpop.f32.mrf.mxu0
      %v258 = vadd.f32 0.0, %v257
      %v259 = vpop.f32.mrf.mxu0
      %260 = vmatprep.mubr.f32.mxu0 0.0
      %261 = vmatmul.mubr.f32.gmra.mxu0 %v179
      %v262 = vpop.f32.mrf.mxu0
      %v263 = vadd.f32 0.0, %v262
      %v264 = vpop.f32.mrf.mxu0
      %265 = vdwg.mxu0
      %v266 = vld [vmem:[%s2] sm:$0x1]
      %v267 = vadd.f32 %v248, %v253
      %v268 = vadd.f32 %v267, %v258
      %v269 = vadd.f32 %v268, %v263
      %v270 = vrot.slane %v269, 4
      %v271 = vadd.f32 %v269, %v270
      %v272 = vrot.slane %v271, 2
      %v273 = vadd.f32 %v271, %v272
      %v274 = vrot.slane %v273, 1
      %v275 = vadd.f32 %v273, %v274
      %v276 = vadd.f32 %v266, %v275
      %277 = vst [vmem:[%s2] sm:$0x1] %v276
      %v278 = vld [vmem:[%s3] sm:$0x1]
      %v279 = vmul.f32 %v248, %v248
      %v280 = vmul.f32 %v253, %v253
      %v281 = vmul.f32 %v258, %v258
      %v282 = vmul.f32 %v263, %v263
      %v283 = vadd.f32 %v279, %v280
      %v284 = vadd.f32 %v283, %v281
      %v285 = vadd.f32 %v284, %v282
      %v286 = vrot.slane %v285, 4
      %v287 = vadd.f32 %v285, %v286
      %v288 = vrot.slane %v287, 2
      %v289 = vadd.f32 %v287, %v288
      %v290 = vrot.slane %v289, 1
      %v291 = vadd.f32 %v289, %v290
      %v292 = vadd.f32 %v278, %v291
      %293 = vst [vmem:[%s3] sm:$0x1] %v292
      // Predicated region
      $region33: #{deconv_block.2} parent=27 // pred_check
        %p294 = pneg %p75
      $region34: #{deconv_block.2} parent=27 // pred_check_branch
        %296 = sbr.rel (%p294) target = $region36
      $region35: #{deconv_block.2} parent=27 // pred_region
        _
      $region36: #{deconv_block.2} parent=27 // pred_fallthru
        _
      // Predicated region
      $region37: #{deconv_block.2} parent=27 // pred_check
        %p297 = pneg %p96
      $region38: #{deconv_block.2} parent=27 // pred_check_branch
        %299 = sbr.rel (%p297) target = $region40
      $region39: #{deconv_block.2} parent=27 // pred_region
        _
      $region40: #{deconv_block.2} parent=27 // pred_fallthru
        _
      // Predicated region
      $region41: #{deconv_block.2} parent=27 // pred_check
        %p300 = pneg %p75
      $region42: #{deconv_block.2} parent=27 // pred_check_branch
        %302 = sbr.rel (%p300) target = $region44
      $region43: #{deconv_block.2} parent=27 // pred_region
        _
      $region44: #{deconv_block.2} parent=27 // pred_fallthru
        _
      // Predicated region
      $region45: #{deconv_block.2} parent=27 // pred_check
        %p303 = pneg %p96
      $region46: #{deconv_block.2} parent=27 // pred_check_branch
        %305 = sbr.rel (%p303) target = $region48
      $region47: #{deconv_block.2} parent=27 // pred_region
        _
      $region48: #{deconv_block.2} parent=27 // pred_fallthru
        _
    $region28: #{deconv_block.2} parent=5 // pred_fallthru
      _
    %p306 = scmp.le.s32.totalorder 2, %s10
    // Predicated region
    $region49: #{deconv_block.2} parent=5 // pred_check
      %p307 = pneg %p306
    $region50: #{deconv_block.2} parent=5 // pred_check_branch
      %309 = sbr.rel (%p307) target = $region52
    $region51: #{deconv_block.2} parent=5 // pred_region
      %s310 = ssub.s32 %s10, 2
    $region52: #{deconv_block.2} parent=5 // pred_fallthru
      _
  $region6: #{deconv_block.2} parent=0 // loop_footer
    %s14 = sadd.s32 1, %s10
  $region7: #{deconv_block.2} parent=0 // loop_footer_branch
    %9 = sbr.rel target = $region3
  $region8: #{deconv_block.2} parent=0 // loop_exit
    _

// kernel: deconv_block.3
$region0: #{deconv_block.3}
  #allocation0 [shape = 'u32[]', space=smem, size = 0x4, offset = 0x4, fixed_abs, tag = 'smem constant byte address 0x4 - core index']
  #allocation1 [shape = 'u32[144,128]{1,0:T(1,128)}', space=vmem, size = 0x12000, scoped, tag = 'internal scratch']
  %s0 = inlined_call_operand.vmem [shape: f32[128,16], index: 0, kind: input, shape index: {}]
  %s1 = inlined_call_operand.vmem [shape: f32[16,128], index: 1, kind: input, shape index: {}]
  %s2 = inlined_call_operand.vmem [shape: f32[1,128], index: 2, kind: input, shape index: {}]
  %s3 = inlined_call_operand.vmem [shape: f32[1,128], index: 3, kind: input, shape index: {}]
  %s4 = inlined_call_operand.vmem [shape: f32[128,128], index: 4, kind: output, shape index: {}]
  %s5 = sld [smem:[#allocation0]]
  $region49: #{deconv_block.3} parent=0
    _
  %s7 = ssub.s32 1, %s5
  %s8 = scalar_select 0, %s7, %s5
  loop: start=0, step=1, limit=6
  $region2: #{deconv_block.3} parent=0 // loop_pre_header
    _
  $region3: #{deconv_block.3} parent=0 // loop_header
    %s10 = sphi 0, %s14
    %p11 = scmp.ge.s32.totalorder %s10, 6
    %s20 = sphi 0, %s22
    %s23 = sphi 0, %s20
    %s24 = sphi 0, %s23
    %s40 = sphi 0, %s24
    %s44 = sphi 0, %s44
    %s46 = sphi 0, %s44
    %s47 = sphi 0, %s46
    %s61 = sphi 0, %s47
    %s65 = sphi 0, %s65
    %s67 = sphi 0, %s65
    %s68 = sphi 0, %s67
    %s82 = sphi 0, %s68
    %s86 = sphi 0, %s86
    %s88 = sphi 0, %s86
    %s89 = sphi 0, %s88
    %s103 = sphi 0, %s89
    %s109 = sphi 0, %s111
    %s112 = sphi 0, %s109
    %s113 = sphi 0, %s112
    %s129 = sphi 0, %s113
  $region4: #{deconv_block.3} parent=0 // loop_header_branch
    %13 = sbr.rel (%p11) target = $region8
  $region5: #{deconv_block.3} parent=0 // loop_body
    %s15 = ssub.s32 %s10, 1
    %s16 = ssub.s32 %s10, 2
    %s17 = sadd.s32 %s10, 1
    %s18 = ssub.s32 %s10, %s17
    %p19 = scmp.eq.s32.totalorder %s18, 0
    %s21 = sadd.s32 %s20, 1
    %s22 = scalar_select %p19, %s20, %s21
    %p25 = pneg %p19
    %p26 = scmp.eq.s32.totalorder %s10, 3
    %p27 = por %p25, %p26
    %p28 = scmp.ne.s32.totalorder %s20, %s23
    %p29 = scmp.eq.s32.totalorder %s10, 0
    %p30 = por %p28, %p29
    %p31 = scmp.ne.s32.totalorder %s20, %s23
    %p32 = scmp.eq.s32.totalorder %s15, 3
    %p33 = por %p31, %p32
    %p34 = scmp.ne.s32.totalorder %s23, %s24
    %p35 = scmp.eq.s32.totalorder %s15, 0
    %p36 = por %p34, %p35
    %p37 = scmp.ne.s32.totalorder %s23, %s24
    %p38 = scmp.eq.s32.totalorder %s16, 3
    %p39 = por %p37, %p38
    %p41 = scmp.ne.s32.totalorder %s24, %s40
    %p42 = scmp.eq.s32.totalorder %s16, 0
    %p43 = por %p41, %p42
    %s45 = sadd.s32 %s44, 1
    %p48 = scmp.eq.s32.totalorder %s10, 3
    %p49 = scmp.ne.s32.totalorder %s44, %s46
    %p50 = scmp.eq.s32.totalorder %s10, 0
    %p51 = por %p49, %p50
    %p52 = scmp.ne.s32.totalorder %s44, %s46
    %p53 = scmp.eq.s32.totalorder %s15, 3
    %p54 = por %p52, %p53
    %p55 = scmp.ne.s32.totalorder %s46, %s47
    %p56 = scmp.eq.s32.totalorder %s15, 0
    %p57 = por %p55, %p56
    %p58 = scmp.ne.s32.totalorder %s46, %s47
    %p59 = scmp.eq.s32.totalorder %s16, 3
    %p60 = por %p58, %p59
    %p62 = scmp.ne.s32.totalorder %s47, %s61
    %p63 = scmp.eq.s32.totalorder %s16, 0
    %p64 = por %p62, %p63
    %s66 = sadd.s32 %s65, 1
    %p69 = scmp.eq.s32.totalorder %s10, 3
    %p70 = scmp.ne.s32.totalorder %s65, %s67
    %p71 = scmp.eq.s32.totalorder %s10, 0
    %p72 = por %p70, %p71
    %p73 = scmp.ne.s32.totalorder %s65, %s67
    %p74 = scmp.eq.s32.totalorder %s15, 3
    %p75 = por %p73, %p74
    %p76 = scmp.ne.s32.totalorder %s67, %s68
    %p77 = scmp.eq.s32.totalorder %s15, 0
    %p78 = por %p76, %p77
    %p79 = scmp.ne.s32.totalorder %s67, %s68
    %p80 = scmp.eq.s32.totalorder %s16, 3
    %p81 = por %p79, %p80
    %p83 = scmp.ne.s32.totalorder %s68, %s82
    %p84 = scmp.eq.s32.totalorder %s16, 0
    %p85 = por %p83, %p84
    %s87 = sadd.s32 %s86, 1
    %p90 = scmp.eq.s32.totalorder %s10, 3
    %p91 = scmp.ne.s32.totalorder %s86, %s88
    %p92 = scmp.eq.s32.totalorder %s10, 0
    %p93 = por %p91, %p92
    %p94 = scmp.ne.s32.totalorder %s86, %s88
    %p95 = scmp.eq.s32.totalorder %s15, 3
    %p96 = por %p94, %p95
    %p97 = scmp.ne.s32.totalorder %s88, %s89
    %p98 = scmp.eq.s32.totalorder %s15, 0
    %p99 = por %p97, %p98
    %p100 = scmp.ne.s32.totalorder %s88, %s89
    %p101 = scmp.eq.s32.totalorder %s16, 3
    %p102 = por %p100, %p101
    %p104 = scmp.ne.s32.totalorder %s89, %s103
    %p105 = scmp.eq.s32.totalorder %s16, 0
    %p106 = por %p104, %p105
    %s107 = ssub.s32 %s10, %s17
    %p108 = scmp.eq.s32.totalorder %s107, 0
    %s110 = sadd.s32 %s109, 1
    %s111 = scalar_select %p108, %s109, %s110
    %p114 = pneg %p108
    %p115 = scmp.eq.s32.totalorder %s10, 3
    %p116 = por %p114, %p115
    %p117 = scmp.ne.s32.totalorder %s109, %s112
    %p118 = scmp.eq.s32.totalorder %s10, 0
    %p119 = por %p117, %p118
    %p120 = scmp.ne.s32.totalorder %s109, %s112
    %p121 = scmp.eq.s32.totalorder %s15, 3
    %p122 = por %p120, %p121
    %p123 = scmp.ne.s32.totalorder %s112, %s113
    %p124 = scmp.eq.s32.totalorder %s15, 0
    %p125 = por %p123, %p124
    %p126 = scmp.ne.s32.totalorder %s112, %s113
    %p127 = scmp.eq.s32.totalorder %s16, 3
    %p128 = por %p126, %p127
    %p130 = scmp.ne.s32.totalorder %s113, %s129
    %p131 = scmp.eq.s32.totalorder %s16, 0
    %p132 = por %p130, %p131
    %p133 = scmp.le.s32.totalorder 1, %s10
    %p134 = scmp.lt.s32.totalorder %s10, 5
    %p135 = pnand %p133, %p134
    %p136 = pneg %p135
    // Predicated region
    $region9: #{deconv_block.3} parent=5 // pred_check
      _
    $region10: #{deconv_block.3} parent=5 // pred_check_branch
      %138 = sbr.rel (%p135) target = $region12
    $region11: #{deconv_block.3} parent=5 // pred_region
      %s139 = ssub.s32 %s10, 1
      // Predicated region
      $region13: #{deconv_block.3} parent=11 // pred_check
        %p140 = pneg %p57
      $region14: #{deconv_block.3} parent=11 // pred_check_branch
        %142 = sbr.rel (%p140) target = $region16
      $region15: #{deconv_block.3} parent=11 // pred_region
        _
      $region16: #{deconv_block.3} parent=11 // pred_fallthru
        _
      // Predicated region
      $region17: #{deconv_block.3} parent=11 // pred_check
        %p143 = pneg %p78
      $region18: #{deconv_block.3} parent=11 // pred_check_branch
        %145 = sbr.rel (%p143) target = $region20
      $region19: #{deconv_block.3} parent=11 // pred_region
        _
      $region20: #{deconv_block.3} parent=11 // pred_fallthru
        _
      // Predicated region
      $region21: #{deconv_block.3} parent=11 // pred_check
        %p146 = pneg %p99
      $region22: #{deconv_block.3} parent=11 // pred_check_branch
        %148 = sbr.rel (%p146) target = $region24
      $region23: #{deconv_block.3} parent=11 // pred_region
        _
      $region24: #{deconv_block.3} parent=11 // pred_fallthru
        _
    $region12: #{deconv_block.3} parent=5 // pred_fallthru
      _
    %p149 = scmp.lt.s32.totalorder %s10, 4
    // Predicated region
    $region25: #{deconv_block.3} parent=5 // pred_check
      %p150 = pneg %p149
    $region26: #{deconv_block.3} parent=5 // pred_check_branch
      %152 = sbr.rel (%p150) target = $region28
    $region27: #{deconv_block.3} parent=5 // pred_region
      // Predicated region
      $region29: #{deconv_block.3} parent=27 // pred_check
        %p153 = pneg %p30
      $region30: #{deconv_block.3} parent=27 // pred_check_branch
        %155 = sbr.rel (%p153) target = $region32
      $region31: #{deconv_block.3} parent=27 // pred_region
        %s156 = smul.u32 4, %s10
        %p157 = scmp.lt.s32.totalorder %s156, 15
        %s158 = scalar_select %p157, %s156, 15
        %s159 = smul.addr %s158, 8
        %s160 = scalar_lea.vmem %s0, %s159
        %s161 = smul.u32 4, %s10
      $region32: #{deconv_block.3} parent=27 // pred_fallthru
        _
    $region28: #{deconv_block.3} parent=5 // pred_fallthru
      _
    %p162 = scmp.le.s32.totalorder 1, %s10
    %p163 = scmp.lt.s32.totalorder %s10, 5
    %p164 = pnand %p162, %p163
    %p165 = pneg %p164
    // Predicated region
    $region33: #{deconv_block.3} parent=5 // pred_check
      _
    $region34: #{deconv_block.3} parent=5 // pred_check_branch
      %167 = sbr.rel (%p164) target = $region36
    $region35: #{deconv_block.3} parent=5 // pred_region
      %s168 = ssub.s32 %s10, 1
      %s169 = smul.u32 4, %s15
      %p170 = scmp.lt.s32.totalorder %s169, 15
      %s171 = scalar_select %p170, %s169, 15
      %s172 = smul.addr %s171, 8
      %s173 = scalar_lea.vmem %s0, %s172
      %p174 = pneg %p36
      %p175 = pneg %p33
      %p176 = pneg %p57
      %p177 = pneg %p54
      %p178 = pneg %p78
      %p179 = pneg %p75
      %p180 = pneg %p99
      %p181 = pneg %p96
      %p182 = pneg %p125
      %p183 = pneg %p122
      %s184 = smul.u32 4, %s15
      %p185 = scmp.lt.s32.totalorder %s184, 15
      %s186 = scalar_select %p185, %s184, 15
      %s187 = smul.addr %s186, 8
      %s188 = scalar_lea.vmem %s4, %s187
      %s189 = smul.u32 4, %s15
      %p190 = scmp.lt.s32.totalorder %s189, 15
      %s191 = scalar_select %p190, %s189, 15
      %s192 = smul.addr %s191, 8
      %s193 = scalar_lea.vmem %s0, %s192
      %s194 = smul.u32 4, %s15
      %s195 = smul.u32 4, %s15
      %p196 = scmp.lt.s32.totalorder %s195, 15
      %s197 = scalar_select %p196, %s195, 15
      %s198 = smul.addr %s197, 8
      %s199 = scalar_lea.vmem %s4, %s198
      %s200 = smul.u32 4, %s15
      %v201 = vld [vmem:[%s193] sm:$0xff]
      %v202 = vld [vmem:[%s193 + $0x8] sm:$0xff]
      %v203 = vld [vmem:[%s193 + $0x10] sm:$0xff]
      %v204 = vld [vmem:[%s193 + $0x18] sm:$0xff]
      %v205 = vld [vmem:[%s1] sm:$0xff]
      %v206 = vld [vmem:[%s1 + $0x8] sm:$0xff]
      %vm207 = vcmask 130048
      %v209 = vsel %vm207, %v201, 0
      %v212 = vsel %vm207, %v202, 0
      %v215 = vsel %vm207, %v203, 0
      %v218 = vsel %vm207, %v204, 0
      %220 = vmatprep.subr.mxu0 0.0
      %221 = vmatpush1.msra.mxu0 0.0
      %222 = vmatprep.subr.mxu0 0.0
      %223 = vmatpush1.msra.mxu0 0.0
      %224 = vmatprep.subr.mxu0 0.0
      %225 = vmatpush1.msra.mxu0 0.0
      %226 = vmatprep.subr.mxu0 0.0
      %227 = vmatpush1.msra.mxu0 0.0
      %228 = vmatprep.subr.mxu0 0.0
      %229 = vmatpush1.msra.mxu0 0.0
      %230 = vmatprep.subr.mxu0 0.0
      %231 = vmatpush1.msra.mxu0 0.0
      %232 = vmatprep.subr.mxu0 0.0
      %233 = vmatpush1.msra.mxu0 0.0
      %234 = vmatprep.subr.mxu0 0.0
      %235 = vmatpush1.msra.mxu0 0.0
      %236 = vmatprep.subr.mxu0 0.0
      %237 = vmatpush1.msra.mxu0 0.0
      %238 = vmatprep.subr.mxu0 0.0
      %239 = vmatpush1.msra.mxu0 0.0
      %240 = vmatprep.subr.mxu0 0.0
      %241 = vmatpush1.msra.mxu0 0.0
      %242 = vmatprep.subr.mxu0 0.0
      %243 = vmatpush1.msra.mxu0 0.0
      %244 = vmatprep.subr.mxu0 0.0
      %245 = vmatpush1.msra.mxu0 0.0
      %246 = vmatprep.subr.mxu0 0.0
      %247 = vmatpush1.msra.mxu0 0.0
      %248 = vmatprep.subr.mxu0 0.0
      %249 = vmatpush1.msra.mxu0 %v206
      %250 = vmatprep.subr.mxu0 0.0
      %251 = vmatpush1.msra.mxu0 %v205
      %252 = vmatprep.subr.mxu0 0.0
      %253 = vmatpush2.msra.mxu0 0.0
      %254 = vmatprep.subr.mxu0 0.0
      %255 = vmatpush2.msra.mxu0 0.0
      %256 = vmatprep.subr.mxu0 0.0
      %257 = vmatpush2.msra.mxu0 0.0
      %258 = vmatprep.subr.mxu0 0.0
      %259 = vmatpush2.msra.mxu0 0.0
      %260 = vmatprep.subr.mxu0 0.0
      %261 = vmatpush2.msra.mxu0 0.0
      %262 = vmatprep.subr.mxu0 0.0
      %263 = vmatpush2.msra.mxu0 0.0
      %264 = vmatprep.subr.mxu0 0.0
      %265 = vmatpush2.msra.mxu0 0.0
      %266 = vmatprep.subr.mxu0 0.0
      %267 = vmatpush2.msra.mxu0 0.0
      %268 = vmatprep.subr.mxu0 0.0
      %269 = vmatpush2.msra.mxu0 0.0
      %270 = vmatprep.subr.mxu0 0.0
      %271 = vmatpush2.msra.mxu0 0.0
      %272 = vmatprep.subr.mxu0 0.0
      %273 = vmatpush2.msra.mxu0 0.0
      %274 = vmatprep.subr.mxu0 0.0
      %275 = vmatpush2.msra.mxu0 0.0
      %276 = vmatprep.subr.mxu0 0.0
      %277 = vmatpush2.msra.mxu0 0.0
      %278 = vmatprep.subr.mxu0 0.0
      %279 = vmatpush2.msra.mxu0 0.0
      %280 = vmatprep.subr.mxu0 0.0
      %281 = vmatpush2.msra.mxu0 0.0
      %282 = vmatprep.subr.mxu0 0.0
      %283 = vmatpush2.msra.mxu0 0.0
      %284 = vmatprep.mubr.f32.mxu0 0.0
      %285 = vmatmul.mubr.f32.gmra.mxu0 %v209
      %v286 = vpop.f32.mrf.mxu0
      %v287 = vadd.f32 0.0, %v286
      %v288 = vpop.f32.mrf.mxu0
      %289 = vmatprep.mubr.f32.mxu0 0.0
      %290 = vmatmul.mubr.f32.gmra.mxu0 %v212
      %v291 = vpop.f32.mrf.mxu0
      %v292 = vadd.f32 0.0, %v291
      %v293 = vpop.f32.mrf.mxu0
      %294 = vmatprep.mubr.f32.mxu0 0.0
      %295 = vmatmul.mubr.f32.gmra.mxu0 %v215
      %v296 = vpop.f32.mrf.mxu0
      %v297 = vadd.f32 0.0, %v296
      %v298 = vpop.f32.mrf.mxu0
      %299 = vmatprep.mubr.f32.mxu0 0.0
      %300 = vmatmul.mubr.f32.gmra.mxu0 %v218
      %v301 = vpop.f32.mrf.mxu0
      %v302 = vadd.f32 0.0, %v301
      %v303 = vpop.f32.mrf.mxu0
      %304 = vdwg.mxu0
      %v305 = vld [vmem:[%s2] sm:$0x1]
      %v307 = vlaneseq
      %v308 = vshrl.u32 %v307, 7
      %v309 = vsub.s32 0, %v308
      %v310 = vrot.slane %v305, %v309
      %v312 = vmul.f32 %v287, %v310
      %v313 = vmul.f32 %v292, %v310
      %v314 = vmul.f32 %v297, %v310
      %v315 = vmul.f32 %v302, %v310
      %v316 = vld [vmem:[%s3] sm:$0x1]
      %v318 = vlaneseq
      %v319 = vshrl.u32 %v318, 7
      %v320 = vsub.s32 0, %v319
      %v321 = vrot.slane %v316, %v320
      %v323 = vadd.f32 %v312, %v321
      %v324 = vadd.f32 %v313, %v321
      %v325 = vadd.f32 %v314, %v321
      %v326 = vadd.f32 %v315, %v321
      %v327 = vmul.f32 %v323, 0.5
      %v328 = vmul.f32 %v324, 0.5
      %v329 = vmul.f32 %v325, 0.5
      %v330 = vmul.f32 %v326, 0.5
      %v331 = vmul.f32 %v323, 0.70710677
      %v332 = vmul.f32 %v324, 0.70710677
      %v333 = vmul.f32 %v325, 0.70710677
      %v334 = vmul.f32 %v326, 0.70710677
      %v335 = verf.f32.pop %v331
      %v336 = verf.f32.pop %v332
      %v337 = verf.f32.pop %v333
      %v338 = verf.f32.pop %v334
      %v339 = vadd.f32 %v335, 1.0
      %v340 = vadd.f32 %v336, 1.0
      %v341 = vadd.f32 %v337, 1.0
      %v342 = vadd.f32 %v338, 1.0
      %v343 = vmul.f32 %v327, %v339
      %v344 = vmul.f32 %v328, %v340
      %v345 = vmul.f32 %v329, %v341
      %v346 = vmul.f32 %v330, %v342
      %347 = vst [vmem:[%s199] sm:$0xff] %v343
      %348 = vst [vmem:[%s199 + $0x8] sm:$0xff] %v344
      %349 = vst [vmem:[%s199 + $0x10] sm:$0xff] %v345
      %350 = vst [vmem:[%s199 + $0x18] sm:$0xff] %v346
      %s351 = smul.u32 4, %s15
      %p352 = scmp.lt.s32.totalorder %s351, 15
      %s353 = scalar_select %p352, %s351, 15
      %s354 = smul.addr %s353, 8
      %s355 = scalar_lea.vmem %s4, %s354
      // Predicated region
      $region37: #{deconv_block.3} parent=35 // pred_check
        %p356 = pneg %p122
      $region38: #{deconv_block.3} parent=35 // pred_check_branch
        %358 = sbr.rel (%p356) target = $region40
      $region39: #{deconv_block.3} parent=35 // pred_region
        %s359 = smul.u32 4, %s15
      $region40: #{deconv_block.3} parent=35 // pred_fallthru
        _
    $region36: #{deconv_block.3} parent=5 // pred_fallthru
      _
    %p360 = scmp.le.s32.totalorder 2, %s10
    // Predicated region
    $region41: #{deconv_block.3} parent=5 // pred_check
      %p361 = pneg %p360
    $region42: #{deconv_block.3} parent=5 // pred_check_branch
      %363 = sbr.rel (%p361) target = $region44
    $region43: #{deconv_block.3} parent=5 // pred_region
      %s364 = ssub.s32 %s10, 2
      // Predicated region
      $region45: #{deconv_block.3} parent=43 // pred_check
        %p365 = pneg %p128
      $region46: #{deconv_block.3} parent=43 // pred_check_branch
        %367 = sbr.rel (%p365) target = $region48
      $region47: #{deconv_block.3} parent=43 // pred_region
        %s368 = smul.u32 4, %s16
        %p369 = scmp.lt.s32.totalorder %s368, 15
        %s370 = scalar_select %p369, %s368, 15
        %s371 = smul.addr %s370, 8
        %s372 = scalar_lea.vmem %s4, %s371
      $region48: #{deconv_block.3} parent=43 // pred_fallthru
        _
    $region44: #{deconv_block.3} parent=5 // pred_fallthru
      _
  $region6: #{deconv_block.3} parent=0 // loop_footer
    %s14 = sadd.s32 1, %s10
  $region7: #{deconv_block.3} parent=0 // loop_footer_branch
    %9 = sbr.rel target = $region3
  $region8: #{deconv_block.3} parent=0 // loop_exit
    _

</llo_original>
